<compile_context>
chip_gen: v5e
topology: v5e:2x2
jax: 0.10.0
libtpu: 0.0.40
codegen_flags: <defaults>
</compile_context>

<pallas_src>
import functools

import jax
import jax.numpy as jnp
from jax.experimental import pallas as pl
from jax.experimental.pallas import tpu as pltpu


def _round_up(x, m):
    return ((x + m - 1) // m) * m


def _pick_tb(B):
    """Largest divisor of B that is <= 8 and (for B >= 2) leaves >= 2 batch
    blocks, so the parallel batch axis can be sharded across TensorCores."""
    cap = 8 if B < 2 else max(1, min(8, B // 2))
    for t in range(cap, 0, -1):
        if B % t == 0:
            return t
    return 1


def _pick_t_hw(HW, max_hw):
    """Spatial (lane-axis) tile size.  Returns (t_hw, HW_pad) with t_hw either
    a multiple of 128 or the full spatial extent, and HW_pad % t_hw == 0."""
    if HW % 128 == 0:
        t = min(max_hw, HW)
        while HW % t != 0:
            t -= 128
        return t, HW
    if _round_up(HW, 128) <= max_hw:
        # Whole spatial extent in one block (block dim == full array dim).
        return HW, HW
    HW_pad = _round_up(HW, 128)
    t = min(max_hw, HW_pad)
    while HW_pad % t != 0:
        t -= 128
    return t, HW_pad


def _se_kernel(x_ref, w1_ref, b1_ref, w2_ref, b2_ref, o_ref, acc_ref, *, inv_hw):
    # x_ref : (tb, C, t_hw)   NCHW-flat tile, H*W on the lane axis
    # w1_ref: (C, Cr)  b1_ref: (1, Cr)
    # w2_ref: (Cr, C)  b2_ref: (1, C)
    # o_ref : (1, tb, C)      channel-attention output block
    # acc_ref: (tb, C) f32    running spatial sum (persists across HW steps)
    hw_id = pl.program_id(1)

    @pl.when(hw_id == 0)
    def _init():
        acc_ref[...] = jnp.zeros_like(acc_ref)

    # Squeeze: lane reduction over the spatial axis, accumulated in f32
    # (upcast fused into the reduce — no f32 temporary of the full tile).
    acc_ref[...] += jnp.sum(x_ref[...], axis=-1, dtype=jnp.float32)

    @pl.when(hw_id == pl.num_programs(1) - 1)
    def _finalize():
        # Scale by 1/(H*W) exactly once, then run the excitation MLP.
        pooled = acc_ref[...] * inv_hw                                    # (tb, C)
        h = jnp.dot(pooled, w1_ref[...],
                    preferred_element_type=jnp.float32) + b1_ref[...]     # (tb, Cr)
        h = jnp.maximum(h, 0.0)
        s = jnp.dot(h, w2_ref[...],
                    preferred_element_type=jnp.float32) + b2_ref[...]     # (tb, C)
        o_ref[0] = jax.nn.sigmoid(s).astype(o_ref.dtype)


def se_block(x_nchw, w1, b1, w2, b2):
    """SEblock forward.

    x_nchw : (B, C, H, W) float32 or bfloat16
    w1     : (Cr, C)  torch Linear weight (out, in)
    b1     : (Cr,)
    w2     : (C, Cr)
    b2     : (C,)
    returns: (B, C, 1, 1) float32 channel attention
    """
    B, C, H, W = x_nchw.shape
    Cr = w1.shape[0]
    HW = H * W
    elt = jnp.dtype(x_nchw.dtype).itemsize

    # NCHW ingested directly: (B, C, H*W) is a free metadata reshape.
    x_flat = x_nchw.reshape(B, C, HW)

    tb = _pick_tb(B)
    n_b = B // tb

    # Spatial tile: ~4 MiB per (double-buffered) input buffer, lane-dense,
    # with sublane (C) padding accounted for.
    target_bytes = 4 * 1024 * 1024
    c_sub = _round_up(C, 8)
    max_hw = max(128, (target_bytes // (tb * c_sub * elt)) // 128 * 128)
    t_hw, HW_pad = _pick_t_hw(HW, max_hw)
    if HW_pad != HW:
        # Zero padding does not bias the sum; we divide by the true H*W.
        x_flat = jnp.pad(x_flat, ((0, 0), (0, 0), (0, HW_pad - HW)))
    n_hw = HW_pad // t_hw

    # Weights as (in, out) f32 for row-major matmuls.
    w1_t = w1.T.astype(jnp.float32)            # (C, Cr)
    w2_t = w2.T.astype(jnp.float32)            # (Cr, C)
    b1_r = b1.reshape(1, Cr).astype(jnp.float32)
    b2_r = b2.reshape(1, C).astype(jnp.float32)

    # Scoped-VMEM limit from the actual (padded, buffer-count aware) footprint.
    x_buf = tb * c_sub * _round_up(t_hw, 128) * elt                 # one x buffer
    w_buf = 4 * (c_sub * _round_up(Cr, 128) + 8 * _round_up(Cr, 128)
                 + _round_up(Cr, 8) * _round_up(C, 128) + 8 * _round_up(C, 128))
    misc = 4 * tb * _round_up(C, 128) * 4                           # acc + out blocks
    vmem_need = 2 * x_buf + 2 * w_buf + misc
    vmem_limit = int(min(64 * 1024 * 1024,
                         max(32 * 1024 * 1024, vmem_need + (8 << 20))))

    cost = pl.CostEstimate(
        flops=int(B * HW * C + 2 * 2 * B * C * Cr),
        transcendentals=int(B * C),
        bytes_accessed=int(B * HW * C * elt + (2 * C * Cr + Cr + C) * 4 + B * C * 4),
    )

    kernel = functools.partial(_se_kernel, inv_hw=1.0 / float(HW))

    out = pl.pallas_call(
        kernel,
        out_shape=jax.ShapeDtypeStruct((n_b, tb, C), jnp.float32),
        grid_spec=pltpu.PrefetchScalarGridSpec(
            num_scalar_prefetch=0,
            grid=(n_b, n_hw),
            in_specs=[
                pl.BlockSpec((tb, C, t_hw), lambda b, k: (b, 0, k)),
                pl.BlockSpec((C, Cr), lambda b, k: (0, 0)),
                pl.BlockSpec((1, Cr), lambda b, k: (0, 0)),
                pl.BlockSpec((Cr, C), lambda b, k: (0, 0)),
                pl.BlockSpec((1, C), lambda b, k: (0, 0)),
            ],
            out_specs=pl.BlockSpec((1, tb, C), lambda b, k: (b, 0, 0)),
            scratch_shapes=[pltpu.VMEM((tb, C), jnp.float32)],
        ),
        compiler_params=pltpu.CompilerParams(
            dimension_semantics=("parallel", "arbitrary"),
            vmem_limit_bytes=vmem_limit,
        ),
        cost_estimate=cost,
    )(x_flat, w1_t, b1_r, w2_t, b2_r)

    return out.reshape(B, C, 1, 1)


def _reference(x_nchw, w1, b1, w2, b2):
    # Pure-JAX reference of the PyTorch forward.
    pooled = jnp.mean(x_nchw.astype(jnp.float32), axis=(2, 3))   # (B, C)
    h = jnp.maximum(pooled @ w1.T + b1, 0.0)                     # (B, Cr)
    s = jax.nn.sigmoid(h @ w2.T + b2)                            # (B, C)
    return s[:, :, None, None]


if __name__ == "__main__":
    B, C, H, W = 2, 64, 16, 16
    r = 16
    Cr = C // r  # 4

    key = jax.random.PRNGKey(0)
    kx, k1, k2, k3, k4 = jax.random.split(key, 5)

    x = jax.random.normal(kx, (B, C, H, W), dtype=jnp.float32)
    # torch Linear shapes: (out, in)
    w1 = jax.random.normal(k1, (Cr, C), dtype=jnp.float32) * 0.1
    b1 = jax.random.normal(k2, (Cr,), dtype=jnp.float32) * 0.1
    w2 = jax.random.normal(k3, (C, Cr), dtype=jnp.float32) * 0.1
    b2 = jax.random.normal(k4, (C,), dtype=jnp.float32) * 0.1

    out = se_block(x, w1, b1, w2, b2)
    jax.block_until_ready(out)

    ref = _reference(x, w1, b1, w2, b2)
    assert out.shape == (B, C, 1, 1)
    assert jnp.allclose(out, ref, atol=1e-5, rtol=1e-5), "mismatch vs reference"

    print("KERNEL_OK")
</pallas_src>

<mosaic_0001>
module attributes {stable_mosaic.version = 11 : i64} {
  func.func @_se_kernel(%arg0: i32, %arg1: i32, %arg2: memref<1x64x256xf32, #tpu.memory_space<vmem>>, %arg3: memref<64x4xf32, #tpu.memory_space<vmem>>, %arg4: memref<1x4xf32, #tpu.memory_space<vmem>>, %arg5: memref<4x64xf32, #tpu.memory_space<vmem>>, %arg6: memref<1x64xf32, #tpu.memory_space<vmem>>, %arg7: memref<1x1x64xf32, #tpu.memory_space<vmem>>, %arg8: memref<1x64xf32, #tpu.memory_space<vmem>>) attributes {dimension_semantics = [#tpu.dimension_semantics<parallel>, #tpu.dimension_semantics<arbitrary>], iteration_bounds = array<i64: 2, 1>, scalar_prefetch = 0 : i64, scratch_operands = 1 : i64, tpu.core_type = #tpu.core_type<tc>, window_params = [{transform_indices = @transform_0, window_bounds = array<i64: 1, 64, 256>}, {pipeline_mode = #tpu.pipeline_mode<synchronous>, transform_indices = @transform_1, window_bounds = array<i64: 64, 4>}, {pipeline_mode = #tpu.pipeline_mode<synchronous>, transform_indices = @transform_2, window_bounds = array<i64: 1, 4>}, {pipeline_mode = #tpu.pipeline_mode<synchronous>, transform_indices = @transform_3, window_bounds = array<i64: 4, 64>}, {pipeline_mode = #tpu.pipeline_mode<synchronous>, transform_indices = @transform_4, window_bounds = array<i64: 1, 64>}, {transform_indices = @transform_5, window_bounds = array<i64: 1, 1, 64>}]} {
    %c0_i32 = arith.constant 0 : i32
    %0 = arith.cmpi eq, %arg1, %c0_i32 : i32
    %1 = arith.extui %0 : i1 to i32
    %c0_i32_0 = arith.constant 0 : i32
    %2 = arith.cmpi ne, %1, %c0_i32_0 : i32
    scf.if %2 {
      %cst_9 = arith.constant 0.000000e+00 : f32
      %11 = vector.broadcast %cst_9 : f32 to vector<1x64xf32>
      %c0_10 = arith.constant 0 : index
      %c0_11 = arith.constant 0 : index
      %12 = vector.load %arg8[%c0_10, %c0_11] : memref<1x64xf32, #tpu.memory_space<vmem>>, vector<1x64xf32>
      tpu.vector_store %arg8[%c0_10, %c0_11], %11 {strides = array<i32>} : memref<1x64xf32, #tpu.memory_space<vmem>>, vector<1x64xf32>,
    } else {
    }
    %c0 = arith.constant 0 : index
    %c0_1 = arith.constant 0 : index
    %3 = vector.load %arg8[%c0, %c0_1] : memref<1x64xf32, #tpu.memory_space<vmem>>, vector<1x64xf32>
    %c0_2 = arith.constant 0 : index
    %c0_3 = arith.constant 0 : index
    %c0_4 = arith.constant 0 : index
    %4 = vector.load %arg2[%c0_2, %c0_3, %c0_4] : memref<1x64x256xf32, #tpu.memory_space<vmem>>, vector<1x64x256xf32>
    %cst = arith.constant dense<0.000000e+00> : vector<1x64xf32>
    %5 = vector.multi_reduction <add>, %4, %cst [2] : vector<1x64x256xf32> to vector<1x64xf32>
    %6 = arith.addf %3, %5 : vector<1x64xf32>
    %c0_5 = arith.constant 0 : index
    %c0_6 = arith.constant 0 : index
    %7 = vector.load %arg8[%c0_5, %c0_6] : memref<1x64xf32, #tpu.memory_space<vmem>>, vector<1x64xf32>
    tpu.vector_store %arg8[%c0_5, %c0_6], %6 {strides = array<i32>} : memref<1x64xf32, #tpu.memory_space<vmem>>, vector<1x64xf32>,
    %c0_i32_7 = arith.constant 0 : i32
    %8 = arith.cmpi eq, %arg1, %c0_i32_7 : i32
    %9 = arith.extui %8 : i1 to i32
    %c0_i32_8 = arith.constant 0 : i32
    %10 = arith.cmpi ne, %9, %c0_i32_8 : i32
    scf.if %10 {
      %c0_9 = arith.constant 0 : index
      %c0_10 = arith.constant 0 : index
      %11 = vector.load %arg8[%c0_9, %c0_10] : memref<1x64xf32, #tpu.memory_space<vmem>>, vector<1x64xf32>
      %cst_11 = arith.constant 3.906250e-03 : f32
      %12 = vector.broadcast %cst_11 : f32 to vector<1x64xf32>
      %13 = arith.mulf %11, %12 : vector<1x64xf32>
      %c0_12 = arith.constant 0 : index
      %c0_13 = arith.constant 0 : index
      %14 = vector.load %arg3[%c0_12, %c0_13] : memref<64x4xf32, #tpu.memory_space<vmem>>, vector<64x4xf32>
      %cst_14 = arith.constant dense<0.000000e+00> : vector<1x4xf32>
      %15 = tpu.matmul %13, %14, %cst_14 {dimension_numbers = #tpu.dot_dimension_numbers<[1], [0], [0], [1], [0, 0, 1, 1], [], []>} : vector<1x64xf32>, vector<64x4xf32>, vector<1x4xf32> -> vector<1x4xf32>
      %c0_15 = arith.constant 0 : index
      %c0_16 = arith.constant 0 : index
      %16 = vector.load %arg4[%c0_15, %c0_16] : memref<1x4xf32, #tpu.memory_space<vmem>>, vector<1x4xf32>
      %17 = arith.addf %15, %16 : vector<1x4xf32>
      %cst_17 = arith.constant 0.000000e+00 : f32
      %18 = vector.broadcast %cst_17 : f32 to vector<1x4xf32>
      %19 = arith.maximumf %17, %18 : vector<1x4xf32>
      %c0_18 = arith.constant 0 : index
      %c0_19 = arith.constant 0 : index
      %20 = vector.load %arg5[%c0_18, %c0_19] : memref<4x64xf32, #tpu.memory_space<vmem>>, vector<4x64xf32>
      %cst_20 = arith.constant dense<0.000000e+00> : vector<1x64xf32>
      %21 = tpu.matmul %19, %20, %cst_20 {dimension_numbers = #tpu.dot_dimension_numbers<[1], [0], [0], [1], [0, 0, 1, 1], [], []>} : vector<1x4xf32>, vector<4x64xf32>, vector<1x64xf32> -> vector<1x64xf32>
      %c0_21 = arith.constant 0 : index
      %c0_22 = arith.constant 0 : index
      %22 = vector.load %arg6[%c0_21, %c0_22] : memref<1x64xf32, #tpu.memory_space<vmem>>, vector<1x64xf32>
      %23 = arith.addf %21, %22 : vector<1x64xf32>
      %24 = arith.negf %23 : vector<1x64xf32>
      %25 = math.exp %24 : vector<1x64xf32>
      %cst_23 = arith.constant 1.000000e+00 : f32
      %26 = vector.broadcast %cst_23 : f32 to vector<1x64xf32>
      %27 = arith.addf %26, %25 : vector<1x64xf32>
      %28 = arith.divf %26, %27 : vector<1x64xf32>
      %c0_24 = arith.constant 0 : index
      %c0_25 = arith.constant 0 : index
      %c0_26 = arith.constant 0 : index
      %29 = vector.load %arg7[%c0_24, %c0_25, %c0_26] : memref<1x1x64xf32, #tpu.memory_space<vmem>>, vector<1x1x64xf32>
      %30 = vector.shape_cast %29 : vector<1x1x64xf32> to vector<1x64xf32>
      %31 = vector.shape_cast %28 : vector<1x64xf32> to vector<1x1x64xf32>
      tpu.vector_store %arg7[%c0_24, %c0_25, %c0_26], %31 {strides = array<i32>} : memref<1x1x64xf32, #tpu.memory_space<vmem>>, vector<1x1x64xf32>,
    } else {
    }
    return
  }
  func.func @transform_0(%arg0: i32, %arg1: i32) -> (i32, i32, i32) {
    %c0_i32 = arith.constant 0 : i32
    %c0_i32_0 = arith.constant 0 : i32
    return %arg0, %c0_i32, %arg1 : i32, i32, i32
  }
  func.func @transform_1(%arg0: i32, %arg1: i32) -> (i32, i32) {
    %c0_i32 = arith.constant 0 : i32
    %c0_i32_0 = arith.constant 0 : i32
    %c0_i32_1 = arith.constant 0 : i32
    return %c0_i32, %c0_i32_0 : i32, i32
  }
  func.func @transform_2(%arg0: i32, %arg1: i32) -> (i32, i32) {
    %c0_i32 = arith.constant 0 : i32
    %c0_i32_0 = arith.constant 0 : i32
    %c0_i32_1 = arith.constant 0 : i32
    return %c0_i32, %c0_i32_0 : i32, i32
  }
  func.func @transform_3(%arg0: i32, %arg1: i32) -> (i32, i32) {
    %c0_i32 = arith.constant 0 : i32
    %c0_i32_0 = arith.constant 0 : i32
    %c0_i32_1 = arith.constant 0 : i32
    return %c0_i32, %c0_i32_0 : i32, i32
  }
  func.func @transform_4(%arg0: i32, %arg1: i32) -> (i32, i32) {
    %c0_i32 = arith.constant 0 : i32
    %c0_i32_0 = arith.constant 0 : i32
    %c0_i32_1 = arith.constant 0 : i32
    return %c0_i32, %c0_i32_0 : i32, i32
  }
  func.func @transform_5(%arg0: i32, %arg1: i32) -> (i32, i32, i32) {
    %c0_i32 = arith.constant 0 : i32
    %c0_i32_0 = arith.constant 0 : i32
    %c0_i32_1 = arith.constant 0 : i32
    return %arg0, %c0_i32, %c0_i32_0 : i32, i32, i32
  }
}

</mosaic_0001>

<llo_original>
// kernel: tpu_custom_call.1
$region0: #{tpu_custom_call.1}
  #allocation0 [shape = 'u32[]', space=smem, size = 0x4, offset = 0x4, fixed_abs, tag = 'smem constant byte address 0x4 - core index']
  #allocation1 [shape = 'u32[72,128]{1,0:T(1,128)}', space=vmem, size = 0x9000, scoped, tag = 'internal scratch']
  #allocation2 [shape = 'f32[1,64]{1,0:T(1,128)}', space=vmem, size = 0x200, scoped, tag = 'scratch operand']
  %s0 = inlined_call_operand.hbm [shape: f32[2,64,256], index: 0, kind: input, shape index: {}]
  %s1 = inlined_call_operand.vmem [shape: f32[64,4], index: 1, kind: input, shape index: {}]
  %s2 = inlined_call_operand.vmem [shape: f32[1,4], index: 2, kind: input, shape index: {}]
  %s3 = inlined_call_operand.vmem [shape: f32[4,64], index: 3, kind: input, shape index: {}]
  %s4 = inlined_call_operand.vmem [shape: f32[1,64], index: 4, kind: input, shape index: {}]
  %s5 = inlined_call_operand.hbm [shape: f32[2,1,64], index: 5, kind: output, shape index: {}]
  %s6 = sld [smem:[#allocation0]]
  $region65: #{tpu_custom_call.1} parent=0
    _
  %s8 = ssub.s32 1, %s6
  %s9 = scalar_select 0, %s8, %s6
  $region1: #{tpu_custom_call.1} parent=0
    #allocation3 [shape = 'u8[131072]{0}', space=vmem, size = 0x20000, scoped, tag = 'input window, operand 0']
    #allocation4 [shape = 's32[2]{0}', space=sflag, size = 0x8, scoped, tag = 'scoped memory for tpu_custom_call.1']
    #allocation5 [shape = 's32[2]{0}', space=sflag, size = 0x8, scoped, tag = 'scoped memory for tpu_custom_call.1']
    #allocation6 [shape = 'u8[1024]{0}', space=vmem, size = 0x400, scoped, tag = 'output window, operand 0']
    %10 = vsyncpa [#allocation4], 0
    %s11 = scalar_lea.sflag [#allocation4], 1
    %12 = vsyncpa %s11, 0
    %13 = vsyncpa [#allocation5], 0
    %s14 = scalar_lea.sflag [#allocation5], 1
    %15 = vsyncpa %s14, 0
    loop: start=0, step=1, limit=4
    $region2: #{tpu_custom_call.1} parent=1 // loop_pre_header
      _
    $region3: #{tpu_custom_call.1} parent=1 // loop_header
      %s17 = sphi 0, %s21
      %p18 = scmp.ge.s32.totalorder %s17, 4
      %s24 = sphi 0, %s36
      %s25 = sphi 0, %s32
      %s26 = sphi 0, %s24
      %s27 = sphi 0, %s25
      %s28 = sphi 0, %s26
      %s29 = sphi 0, %s27
      %s41 = sphi 0, %s43
      %s44 = sphi 0, %s41
      %s45 = sphi 0, %s44
      %s61 = sphi 0, %s45
      %s65 = sphi 0, %s65
      %s67 = sphi 0, %s65
      %s68 = sphi 0, %s67
      %s82 = sphi 0, %s68
      %s86 = sphi 0, %s86
      %s88 = sphi 0, %s86
      %s89 = sphi 0, %s88
      %s103 = sphi 0, %s89
      %s107 = sphi 0, %s107
      %s109 = sphi 0, %s107
      %s110 = sphi 0, %s109
      %s124 = sphi 0, %s110
      %s128 = sphi 0, %s128
      %s130 = sphi 0, %s128
      %s131 = sphi 0, %s130
      %s145 = sphi 0, %s131
      %s151 = sphi 0, %s153
      %s154 = sphi 0, %s151
      %s155 = sphi 0, %s154
      %s171 = sphi 0, %s155
    $region4: #{tpu_custom_call.1} parent=1 // loop_header_branch
      %20 = sbr.rel (%p18) target = $region8
    $region5: #{tpu_custom_call.1} parent=1 // loop_body
      %s22 = ssub.s32 %s17, 1
      %s23 = ssub.s32 %s17, 2
      %s30 = sadd.s32 1, %s25
      %p31 = scmp.ge.s32.totalorder %s30, 1
      %s32 = scalar_select %p31, 0, %s30
      %s33 = sadd.s32 1, %s24
      %s34 = scalar_select %p31, %s33, %s24
      %p35 = scmp.ge.s32.totalorder %s34, 2
      %s36 = scalar_select %p35, 0, %s34
      %s37 = ssub.s32 %s24, %s36
      %s38 = ssub.s32 %s25, %s32
      %s39 = sor.u32 %s37, %s38
      %p40 = scmp.eq.s32.totalorder %s39, 0
      %s42 = sadd.s32 %s41, 1
      %s43 = scalar_select %p40, %s41, %s42
      %p46 = pneg %p40
      %p47 = scmp.eq.s32.totalorder %s17, 1
      %p48 = por %p46, %p47
      %p49 = scmp.ne.s32.totalorder %s41, %s44
      %p50 = scmp.eq.s32.totalorder %s17, 0
      %p51 = por %p49, %p50
      %p52 = scmp.ne.s32.totalorder %s41, %s44
      %p53 = scmp.eq.s32.totalorder %s22, 1
      %p54 = por %p52, %p53
      %p55 = scmp.ne.s32.totalorder %s44, %s45
      %p56 = scmp.eq.s32.totalorder %s22, 0
      %p57 = por %p55, %p56
      %p58 = scmp.ne.s32.totalorder %s44, %s45
      %p59 = scmp.eq.s32.totalorder %s23, 1
      %p60 = por %p58, %p59
      %p62 = scmp.ne.s32.totalorder %s45, %s61
      %p63 = scmp.eq.s32.totalorder %s23, 0
      %p64 = por %p62, %p63
      %s66 = sadd.s32 %s65, 1
      %p69 = scmp.eq.s32.totalorder %s17, 1
      %p70 = scmp.ne.s32.totalorder %s65, %s67
      %p71 = scmp.eq.s32.totalorder %s17, 0
      %p72 = por %p70, %p71
      %p73 = scmp.ne.s32.totalorder %s65, %s67
      %p74 = scmp.eq.s32.totalorder %s22, 1
      %p75 = por %p73, %p74
      %p76 = scmp.ne.s32.totalorder %s67, %s68
      %p77 = scmp.eq.s32.totalorder %s22, 0
      %p78 = por %p76, %p77
      %p79 = scmp.ne.s32.totalorder %s67, %s68
      %p80 = scmp.eq.s32.totalorder %s23, 1
      %p81 = por %p79, %p80
      %p83 = scmp.ne.s32.totalorder %s68, %s82
      %p84 = scmp.eq.s32.totalorder %s23, 0
      %p85 = por %p83, %p84
      %s87 = sadd.s32 %s86, 1
      %p90 = scmp.eq.s32.totalorder %s17, 1
      %p91 = scmp.ne.s32.totalorder %s86, %s88
      %p92 = scmp.eq.s32.totalorder %s17, 0
      %p93 = por %p91, %p92
      %p94 = scmp.ne.s32.totalorder %s86, %s88
      %p95 = scmp.eq.s32.totalorder %s22, 1
      %p96 = por %p94, %p95
      %p97 = scmp.ne.s32.totalorder %s88, %s89
      %p98 = scmp.eq.s32.totalorder %s22, 0
      %p99 = por %p97, %p98
      %p100 = scmp.ne.s32.totalorder %s88, %s89
      %p101 = scmp.eq.s32.totalorder %s23, 1
      %p102 = por %p100, %p101
      %p104 = scmp.ne.s32.totalorder %s89, %s103
      %p105 = scmp.eq.s32.totalorder %s23, 0
      %p106 = por %p104, %p105
      %s108 = sadd.s32 %s107, 1
      %p111 = scmp.eq.s32.totalorder %s17, 1
      %p112 = scmp.ne.s32.totalorder %s107, %s109
      %p113 = scmp.eq.s32.totalorder %s17, 0
      %p114 = por %p112, %p113
      %p115 = scmp.ne.s32.totalorder %s107, %s109
      %p116 = scmp.eq.s32.totalorder %s22, 1
      %p117 = por %p115, %p116
      %p118 = scmp.ne.s32.totalorder %s109, %s110
      %p119 = scmp.eq.s32.totalorder %s22, 0
      %p120 = por %p118, %p119
      %p121 = scmp.ne.s32.totalorder %s109, %s110
      %p122 = scmp.eq.s32.totalorder %s23, 1
      %p123 = por %p121, %p122
      %p125 = scmp.ne.s32.totalorder %s110, %s124
      %p126 = scmp.eq.s32.totalorder %s23, 0
      %p127 = por %p125, %p126
      %s129 = sadd.s32 %s128, 1
      %p132 = scmp.eq.s32.totalorder %s17, 1
      %p133 = scmp.ne.s32.totalorder %s128, %s130
      %p134 = scmp.eq.s32.totalorder %s17, 0
      %p135 = por %p133, %p134
      %p136 = scmp.ne.s32.totalorder %s128, %s130
      %p137 = scmp.eq.s32.totalorder %s22, 1
      %p138 = por %p136, %p137
      %p139 = scmp.ne.s32.totalorder %s130, %s131
      %p140 = scmp.eq.s32.totalorder %s22, 0
      %p141 = por %p139, %p140
      %p142 = scmp.ne.s32.totalorder %s130, %s131
      %p143 = scmp.eq.s32.totalorder %s23, 1
      %p144 = por %p142, %p143
      %p146 = scmp.ne.s32.totalorder %s131, %s145
      %p147 = scmp.eq.s32.totalorder %s23, 0
      %p148 = por %p146, %p147
      %s149 = ssub.s32 %s24, %s36
      %p150 = scmp.eq.s32.totalorder %s149, 0
      %s152 = sadd.s32 %s151, 1
      %s153 = scalar_select %p150, %s151, %s152
      %p156 = pneg %p150
      %p157 = scmp.eq.s32.totalorder %s17, 1
      %p158 = por %p156, %p157
      %p159 = scmp.ne.s32.totalorder %s151, %s154
      %p160 = scmp.eq.s32.totalorder %s17, 0
      %p161 = por %p159, %p160
      %p162 = scmp.ne.s32.totalorder %s151, %s154
      %p163 = scmp.eq.s32.totalorder %s22, 1
      %p164 = por %p162, %p163
      %p165 = scmp.ne.s32.totalorder %s154, %s155
      %p166 = scmp.eq.s32.totalorder %s22, 0
      %p167 = por %p165, %p166
      %p168 = scmp.ne.s32.totalorder %s154, %s155
      %p169 = scmp.eq.s32.totalorder %s23, 1
      %p170 = por %p168, %p169
      %p172 = scmp.ne.s32.totalorder %s155, %s171
      %p173 = scmp.eq.s32.totalorder %s23, 0
      %p174 = por %p172, %p173
      %p175 = scmp.le.s32.totalorder 1, %s17
      %p176 = scmp.lt.s32.totalorder %s17, 3
      %p177 = pnand %p175, %p176
      %p178 = pneg %p177
      // Predicated region
      $region9: #{tpu_custom_call.1} parent=5 // pred_check
        _
      $region10: #{tpu_custom_call.1} parent=5 // pred_check_branch
        %180 = sbr.rel (%p177) target = $region12
      $region11: #{tpu_custom_call.1} parent=5 // pred_region
        %s181 = ssub.s32 %s17, 1
        // Predicated region
        $region13: #{tpu_custom_call.1} parent=11 // pred_check
          %p182 = pneg %p78
        $region14: #{tpu_custom_call.1} parent=11 // pred_check_branch
          %184 = sbr.rel (%p182) target = $region16
        $region15: #{tpu_custom_call.1} parent=11 // pred_region
          _
        $region16: #{tpu_custom_call.1} parent=11 // pred_fallthru
          _
        // Predicated region
        $region17: #{tpu_custom_call.1} parent=11 // pred_check
          %p185 = pneg %p99
        $region18: #{tpu_custom_call.1} parent=11 // pred_check_branch
          %187 = sbr.rel (%p185) target = $region20
        $region19: #{tpu_custom_call.1} parent=11 // pred_region
          _
        $region20: #{tpu_custom_call.1} parent=11 // pred_fallthru
          _
        // Predicated region
        $region21: #{tpu_custom_call.1} parent=11 // pred_check
          %p188 = pneg %p120
        $region22: #{tpu_custom_call.1} parent=11 // pred_check_branch
          %190 = sbr.rel (%p188) target = $region24
        $region23: #{tpu_custom_call.1} parent=11 // pred_region
          _
        $region24: #{tpu_custom_call.1} parent=11 // pred_fallthru
          _
        // Predicated region
        $region25: #{tpu_custom_call.1} parent=11 // pred_check
          %p191 = pneg %p141
        $region26: #{tpu_custom_call.1} parent=11 // pred_check_branch
          %193 = sbr.rel (%p191) target = $region28
        $region27: #{tpu_custom_call.1} parent=11 // pred_region
          _
        $region28: #{tpu_custom_call.1} parent=11 // pred_fallthru
          _
      $region12: #{tpu_custom_call.1} parent=5 // pred_fallthru
        _
      %p194 = scmp.lt.s32.totalorder %s17, 2
      // Predicated region
      $region29: #{tpu_custom_call.1} parent=5 // pred_check
        %p195 = pneg %p194
      $region30: #{tpu_custom_call.1} parent=5 // pred_check_branch
        %197 = sbr.rel (%p195) target = $region32
      $region31: #{tpu_custom_call.1} parent=5 // pred_region
        // Predicated region
        $region33: #{tpu_custom_call.1} parent=31 // pred_check
          %p198 = pneg %p51
        $region34: #{tpu_custom_call.1} parent=31 // pred_check_branch
          %200 = sbr.rel (%p198) target = $region36
        $region35: #{tpu_custom_call.1} parent=31 // pred_region
          %s201 = sand.u32 %s41, 1
          %s202 = scalar_lea.sflag [#allocation4], %s201
          %s203 = sand.u32 %s41, 1
          %s204 = smul.addr %s203, 128
          %s205 = scalar_lea.vmem [#allocation3], %s204
          %s206 = smul.u32 2, %s25
          %208 = vsyncadd %s202, 0
          %s209 = smul.addr %s24, 16
          %s210 = sadd.s32 %s206, %s209
          %s211 = smul.addr %s210, 8
          %s212 = scalar_lea.hbm %s0, %s211
          %s213 = sshll.u32 %s212, 4
          %s214 = int_to_ptr.hbm [resolvable:$true] %s213
          %s215 = sshll.u32 %s205, 4
          %s216 = int_to_ptr.vmem [resolvable:$true] %s215
          %221 = dma.hbm_to_vmem [thread:$0]  %s214, 2048, %s216, %s202, 256, 256, 16
        $region36: #{tpu_custom_call.1} parent=31 // pred_fallthru
          _
      $region32: #{tpu_custom_call.1} parent=5 // pred_fallthru
        _
      %p222 = scmp.le.s32.totalorder 1, %s17
      %p223 = scmp.lt.s32.totalorder %s17, 3
      %p224 = pnand %p222, %p223
      %p225 = pneg %p224
      // Predicated region
      $region37: #{tpu_custom_call.1} parent=5 // pred_check
        _
      $region38: #{tpu_custom_call.1} parent=5 // pred_check_branch
        %227 = sbr.rel (%p224) target = $region40
      $region39: #{tpu_custom_call.1} parent=5 // pred_region
        %s228 = ssub.s32 %s17, 1
        %s229 = sand.u32 %s44, 1
        %s230 = scalar_lea.sflag [#allocation4], %s229
        %s231 = sand.u32 %s44, 1
        %s232 = smul.addr %s231, 128
        %s233 = scalar_lea.vmem [#allocation3], %s232
        // Predicated region
        $region41: #{tpu_custom_call.1} parent=39 // pred_check
          %p234 = pneg %p57
        $region42: #{tpu_custom_call.1} parent=39 // pred_check_branch
          %236 = sbr.rel (%p234) target = $region44
        $region43: #{tpu_custom_call.1} parent=39 // pred_region
          %238 = dma.done %s230, 2048
        $region44: #{tpu_custom_call.1} parent=39 // pred_fallthru
          _
        %s239 = sand.u32 %s44, 1
        %s240 = scalar_lea.sflag [#allocation4], %s239
        %s241 = sand.u32 %s44, 1
        %s242 = smul.addr %s241, 128
        %s243 = scalar_lea.vmem [#allocation3], %s242
        %p244 = pneg %p57
        %p245 = pneg %p54
        %p246 = pneg %p78
        %p247 = pneg %p75
        %p248 = pneg %p99
        %p249 = pneg %p96
        %p250 = pneg %p120
        %p251 = pneg %p117
        %p252 = pneg %p141
        %p253 = pneg %p138
        %p254 = pneg %p167
        %p255 = pneg %p164
        %s256 = sand.u32 %s154, 1
        %s257 = scalar_lea.sflag [#allocation5], %s256
        %s258 = sand.u32 %s154, 1
        %s259 = scalar_lea.vmem [#allocation6], %s258
        %s260 = smul.u32 2, %s27
        %p261 = scmp.eq.s32.totalorder %s27, 0
        // Predicated region
        $region45: #{tpu_custom_call.1} parent=39 // pred_check
          %p262 = pneg %p261
        $region46: #{tpu_custom_call.1} parent=39 // pred_check_branch
          %264 = sbr.rel (%p262) target = $region48
        $region47: #{tpu_custom_call.1} parent=39 // pred_region
          %vm265 = vcmask 516096
          %266 = vst.msk [vmem:[#allocation2] sm:$0x1] %vm265, 0.0
        $region48: #{tpu_custom_call.1} parent=39 // pred_fallthru
          _
        %v267 = vld [vmem:[#allocation2] sm:$0x1]
        %v268 = vld [vmem:[%s233] sm:$0xff]
        %v269 = vld [vmem:[%s233 + $0x8] sm:$0xff]
        %v270 = vld [vmem:[%s233 + $0x10] sm:$0xff]
        %v271 = vld [vmem:[%s233 + $0x18] sm:$0xff]
        %v272 = vld [vmem:[%s233 + $0x20] sm:$0xff]
        %v273 = vld [vmem:[%s233 + $0x28] sm:$0xff]
        %v274 = vld [vmem:[%s233 + $0x30] sm:$0xff]
        %v275 = vld [vmem:[%s233 + $0x38] sm:$0xff]
        %v276 = vld [vmem:[%s233 + $0x40] sm:$0xff]
        %v277 = vld [vmem:[%s233 + $0x48] sm:$0xff]
        %v278 = vld [vmem:[%s233 + $0x50] sm:$0xff]
        %v279 = vld [vmem:[%s233 + $0x58] sm:$0xff]
        %v280 = vld [vmem:[%s233 + $0x60] sm:$0xff]
        %v281 = vld [vmem:[%s233 + $0x68] sm:$0xff]
        %v282 = vld [vmem:[%s233 + $0x70] sm:$0xff]
        %v283 = vld [vmem:[%s233 + $0x78] sm:$0xff]
        %v284 = vadd.f32 %v268, %v269
        %285 = vadd.xlane.f32.xlu0 %v284
        %v286 = vpop.xlane.xlu0 %285
        %v287 = vadd.f32 %v270, %v271
        %288 = vadd.xlane.f32.xlu0 %v287
        %v289 = vpop.xlane.xlu0 %288
        %v290 = vadd.f32 %v272, %v273
        %291 = vadd.xlane.f32.xlu0 %v290
        %v292 = vpop.xlane.xlu0 %291
        %v293 = vadd.f32 %v274, %v275
        %294 = vadd.xlane.f32.xlu0 %v293
        %v295 = vpop.xlane.xlu0 %294
        %v296 = vadd.f32 %v276, %v277
        %297 = vadd.xlane.f32.xlu0 %v296
        %v298 = vpop.xlane.xlu0 %297
        %v299 = vadd.f32 %v278, %v279
        %300 = vadd.xlane.f32.xlu0 %v299
        %v301 = vpop.xlane.xlu0 %300
        %v302 = vadd.f32 %v280, %v281
        %303 = vadd.xlane.f32.xlu0 %v302
        %v304 = vpop.xlane.xlu0 %303
        %v305 = vadd.f32 %v282, %v283
        %306 = vadd.xlane.f32.xlu0 %v305
        %v307 = vpop.xlane.xlu0 %306
        %v316 = vperm.slane %v286, 0
        %v317 = vperm.slane %v286, 1
        %v318 = vperm.slane %v286, 2
        %v319 = vperm.slane %v286, 3
        %v320 = vperm.slane %v286, 4
        %v321 = vperm.slane %v286, 5
        %v322 = vperm.slane %v286, 6
        %v323 = vperm.slane %v286, 7
        %v324 = vperm.slane %v289, 0
        %v325 = vperm.slane %v289, 1
        %v326 = vperm.slane %v289, 2
        %v327 = vperm.slane %v289, 3
        %v328 = vperm.slane %v289, 4
        %v329 = vperm.slane %v289, 5
        %v330 = vperm.slane %v289, 6
        %v331 = vperm.slane %v289, 7
        %v332 = vperm.slane %v292, 0
        %v333 = vperm.slane %v292, 1
        %v334 = vperm.slane %v292, 2
        %v335 = vperm.slane %v292, 3
        %v336 = vperm.slane %v292, 4
        %v337 = vperm.slane %v292, 5
        %v338 = vperm.slane %v292, 6
        %v339 = vperm.slane %v292, 7
        %v340 = vperm.slane %v295, 0
        %v341 = vperm.slane %v295, 1
        %v342 = vperm.slane %v295, 2
        %v343 = vperm.slane %v295, 3
        %v344 = vperm.slane %v295, 4
        %v345 = vperm.slane %v295, 5
        %v346 = vperm.slane %v295, 6
        %v347 = vperm.slane %v295, 7
        %v348 = vperm.slane %v298, 0
        %v349 = vperm.slane %v298, 1
        %v350 = vperm.slane %v298, 2
        %v351 = vperm.slane %v298, 3
        %v352 = vperm.slane %v298, 4
        %v353 = vperm.slane %v298, 5
        %v354 = vperm.slane %v298, 6
        %v355 = vperm.slane %v298, 7
        %v356 = vperm.slane %v301, 0
        %v357 = vperm.slane %v301, 1
        %v358 = vperm.slane %v301, 2
        %v359 = vperm.slane %v301, 3
        %v360 = vperm.slane %v301, 4
        %v361 = vperm.slane %v301, 5
        %v362 = vperm.slane %v301, 6
        %v363 = vperm.slane %v301, 7
        %v364 = vperm.slane %v304, 0
        %v365 = vperm.slane %v304, 1
        %v366 = vperm.slane %v304, 2
        %v367 = vperm.slane %v304, 3
        %v368 = vperm.slane %v304, 4
        %v369 = vperm.slane %v304, 5
        %v370 = vperm.slane %v304, 6
        %v371 = vperm.slane %v304, 7
        %v372 = vperm.slane %v307, 0
        %v373 = vperm.slane %v307, 1
        %v374 = vperm.slane %v307, 2
        %v375 = vperm.slane %v307, 3
        %v376 = vperm.slane %v307, 4
        %v377 = vperm.slane %v307, 5
        %v378 = vperm.slane %v307, 6
        %v379 = vperm.slane %v307, 7
        %380 = vst [vmem:[#allocation1] ss:$9 sm:$0xff] %v316
        %s381 = scalar_lea.vmem [#allocation1], 1
        %382 = vst [vmem:[%s381] ss:$9 sm:$0xff] %v317
        %s383 = scalar_lea.vmem [#allocation1], 2
        %384 = vst [vmem:[%s383] ss:$9 sm:$0xff] %v318
        %s385 = scalar_lea.vmem [#allocation1], 3
        %386 = vst [vmem:[%s385] ss:$9 sm:$0xff] %v319
        %s387 = scalar_lea.vmem [#allocation1], 4
        %388 = vst [vmem:[%s387] ss:$9 sm:$0xff] %v320
        %s389 = scalar_lea.vmem [#allocation1], 5
        %390 = vst [vmem:[%s389] ss:$9 sm:$0xff] %v321
        %s391 = scalar_lea.vmem [#allocation1], 6
        %392 = vst [vmem:[%s391] ss:$9 sm:$0xff] %v322
        %s393 = scalar_lea.vmem [#allocation1], 7
        %394 = vst [vmem:[%s393] ss:$9 sm:$0xff] %v323
        %v395 = vld [vmem:[#allocation1] sm:$0xff]
        %396 = vst [vmem:[#allocation1] ss:$9 sm:$0xff] %v324
        %397 = vst [vmem:[%s381] ss:$9 sm:$0xff] %v325
        %398 = vst [vmem:[%s383] ss:$9 sm:$0xff] %v326
        %399 = vst [vmem:[%s385] ss:$9 sm:$0xff] %v327
        %400 = vst [vmem:[%s387] ss:$9 sm:$0xff] %v328
        %401 = vst [vmem:[%s389] ss:$9 sm:$0xff] %v329
        %402 = vst [vmem:[%s391] ss:$9 sm:$0xff] %v330
        %403 = vst [vmem:[%s393] ss:$9 sm:$0xff] %v331
        %v404 = vld [vmem:[#allocation1] sm:$0xff]
        %405 = vst [vmem:[#allocation1] ss:$9 sm:$0xff] %v332
        %406 = vst [vmem:[%s381] ss:$9 sm:$0xff] %v333
        %407 = vst [vmem:[%s383] ss:$9 sm:$0xff] %v334
        %408 = vst [vmem:[%s385] ss:$9 sm:$0xff] %v335
        %409 = vst [vmem:[%s387] ss:$9 sm:$0xff] %v336
        %410 = vst [vmem:[%s389] ss:$9 sm:$0xff] %v337
        %411 = vst [vmem:[%s391] ss:$9 sm:$0xff] %v338
        %412 = vst [vmem:[%s393] ss:$9 sm:$0xff] %v339
        %v413 = vld [vmem:[#allocation1] sm:$0xff]
        %414 = vst [vmem:[#allocation1] ss:$9 sm:$0xff] %v340
        %415 = vst [vmem:[%s381] ss:$9 sm:$0xff] %v341
        %416 = vst [vmem:[%s383] ss:$9 sm:$0xff] %v342
        %417 = vst [vmem:[%s385] ss:$9 sm:$0xff] %v343
        %418 = vst [vmem:[%s387] ss:$9 sm:$0xff] %v344
        %419 = vst [vmem:[%s389] ss:$9 sm:$0xff] %v345
        %420 = vst [vmem:[%s391] ss:$9 sm:$0xff] %v346
        %421 = vst [vmem:[%s393] ss:$9 sm:$0xff] %v347
        %v422 = vld [vmem:[#allocation1] sm:$0xff]
        %423 = vst [vmem:[#allocation1] ss:$9 sm:$0xff] %v348
        %424 = vst [vmem:[%s381] ss:$9 sm:$0xff] %v349
        %425 = vst [vmem:[%s383] ss:$9 sm:$0xff] %v350
        %426 = vst [vmem:[%s385] ss:$9 sm:$0xff] %v351
        %427 = vst [vmem:[%s387] ss:$9 sm:$0xff] %v352
        %428 = vst [vmem:[%s389] ss:$9 sm:$0xff] %v353
        %429 = vst [vmem:[%s391] ss:$9 sm:$0xff] %v354
        %430 = vst [vmem:[%s393] ss:$9 sm:$0xff] %v355
        %v431 = vld [vmem:[#allocation1] sm:$0xff]
        %432 = vst [vmem:[#allocation1] ss:$9 sm:$0xff] %v356
        %433 = vst [vmem:[%s381] ss:$9 sm:$0xff] %v357
        %434 = vst [vmem:[%s383] ss:$9 sm:$0xff] %v358
        %435 = vst [vmem:[%s385] ss:$9 sm:$0xff] %v359
        %436 = vst [vmem:[%s387] ss:$9 sm:$0xff] %v360
        %437 = vst [vmem:[%s389] ss:$9 sm:$0xff] %v361
        %438 = vst [vmem:[%s391] ss:$9 sm:$0xff] %v362
        %439 = vst [vmem:[%s393] ss:$9 sm:$0xff] %v363
        %v440 = vld [vmem:[#allocation1] sm:$0xff]
        %441 = vst [vmem:[#allocation1] ss:$9 sm:$0xff] %v364
        %442 = vst [vmem:[%s381] ss:$9 sm:$0xff] %v365
        %443 = vst [vmem:[%s383] ss:$9 sm:$0xff] %v366
        %444 = vst [vmem:[%s385] ss:$9 sm:$0xff] %v367
        %445 = vst [vmem:[%s387] ss:$9 sm:$0xff] %v368
        %446 = vst [vmem:[%s389] ss:$9 sm:$0xff] %v369
        %447 = vst [vmem:[%s391] ss:$9 sm:$0xff] %v370
        %448 = vst [vmem:[%s393] ss:$9 sm:$0xff] %v371
        %v449 = vld [vmem:[#allocation1] sm:$0xff]
        %450 = vst [vmem:[#allocation1] ss:$9 sm:$0xff] %v372
        %451 = vst [vmem:[%s381] ss:$9 sm:$0xff] %v373
        %452 = vst [vmem:[%s383] ss:$9 sm:$0xff] %v374
        %453 = vst [vmem:[%s385] ss:$9 sm:$0xff] %v375
        %454 = vst [vmem:[%s387] ss:$9 sm:$0xff] %v376
        %455 = vst [vmem:[%s389] ss:$9 sm:$0xff] %v377
        %456 = vst [vmem:[%s391] ss:$9 sm:$0xff] %v378
        %457 = vst [vmem:[%s393] ss:$9 sm:$0xff] %v379
        %v458 = vld [vmem:[#allocation1] sm:$0xff]
        %459 = vset.pattern.permute.xlu0 0
        %460 = vperm.xlu0 %459, %v395
        %v461 = vpop.permute.xlu0 %460
        %462 = vset.pattern.permute.xlu0 0
        %463 = vperm.xlu0 %462, %v404
        %v464 = vpop.permute.xlu0 %463
        %465 = vset.pattern.permute.xlu0 0
        %466 = vperm.xlu0 %465, %v413
        %v467 = vpop.permute.xlu0 %466
        %468 = vset.pattern.permute.xlu0 0
        %469 = vperm.xlu0 %468, %v422
        %v470 = vpop.permute.xlu0 %469
        %471 = vset.pattern.permute.xlu0 0
        %472 = vperm.xlu0 %471, %v431
        %v473 = vpop.permute.xlu0 %472
        %474 = vset.pattern.permute.xlu0 0
        %475 = vperm.xlu0 %474, %v440
        %v476 = vpop.permute.xlu0 %475
        %477 = vset.pattern.permute.xlu0 0
        %478 = vperm.xlu0 %477, %v449
        %v479 = vpop.permute.xlu0 %478
        %480 = vset.pattern.permute.xlu0 0
        %481 = vperm.xlu0 %480, %v458
        %v482 = vpop.permute.xlu0 %481
        %v483 = vlaneseq
        %v484 = vand.u32 %v483, 127
        %v485 = vperm.slane %v461, %v484
        %v486 = vadd.s32 %v484, 4294967288
        %v487 = vperm.slane %v464, %v486
        %vm488 = vcmask 130112
        %v489 = vsel %vm488, %v487, %v485
        %v490 = vadd.s32 %v484, 4294967280
        %v491 = vperm.slane %v467, %v490
        %vm492 = vcmask 195712
        %v493 = vsel %vm492, %v491, %v489
        %v494 = vadd.s32 %v484, 4294967272
        %v495 = vperm.slane %v470, %v494
        %vm496 = vcmask 261312
        %v497 = vsel %vm496, %v495, %v493
        %v498 = vadd.s32 %v484, 4294967264
        %v499 = vperm.slane %v473, %v498
        %vm500 = vcmask 326912
        %v501 = vsel %vm500, %v499, %v497
        %v502 = vadd.s32 %v484, 4294967256
        %v503 = vperm.slane %v476, %v502
        %vm504 = vcmask 392512
        %v505 = vsel %vm504, %v503, %v501
        %v506 = vadd.s32 %v484, 4294967248
        %v507 = vperm.slane %v479, %v506
        %vm508 = vcmask 458112
        %v509 = vsel %vm508, %v507, %v505
        %v510 = vadd.s32 %v484, 4294967240
        %v511 = vperm.slane %v482, %v510
        %vm512 = vcmask 523712
        %v513 = vsel %vm512, %v511, %v509
        %v515 = vadd.f32 %v267, %v513
        %vm516 = vcmask 516096
        %517 = vst.msk [vmem:[#allocation2] sm:$0x1] %vm516, %v515
        // Predicated region
        $region49: #{tpu_custom_call.1} parent=39 // pred_check
          %p518 = pneg %p261
        $region50: #{tpu_custom_call.1} parent=39 // pred_check_branch
          %520 = sbr.rel (%p518) target = $region52
        $region51: #{tpu_custom_call.1} parent=39 // pred_region
          %v521 = vld [vmem:[#allocation2] sm:$0x1]
          %v522 = vmul.f32 %v521, 0.00390625
          %v523 = vld [vmem:[%s1] sm:$0xff]
          %v524 = vld [vmem:[%s1 + $0x8] sm:$0xff]
          %v525 = vld [vmem:[%s1 + $0x10] sm:$0xff]
          %v526 = vld [vmem:[%s1 + $0x18] sm:$0xff]
          %v527 = vld [vmem:[%s1 + $0x20] sm:$0xff]
          %v528 = vld [vmem:[%s1 + $0x28] sm:$0xff]
          %v529 = vld [vmem:[%s1 + $0x30] sm:$0xff]
          %v530 = vld [vmem:[%s1 + $0x38] sm:$0xff]
          %v531 = vld [vmem:[%s2] sm:$0x1]
          %vm532 = vcmask 523264
          %v534 = vsel %vm532, %v522, 0
          %536 = vmatpush.msra.mxu0 0.0
          %537 = vmatpush.msra.mxu0 0.0
          %538 = vmatpush.msra.mxu0 0.0
          %539 = vmatpush.msra.mxu0 0.0
          %540 = vmatpush.msra.mxu0 0.0
          %541 = vmatpush.msra.mxu0 0.0
          %542 = vmatpush.msra.mxu0 0.0
          %543 = vmatpush.msra.mxu0 0.0
          %544 = vmatpush.msra.mxu0 %v530
          %545 = vmatpush.msra.mxu0 %v529
          %546 = vmatpush.msra.mxu0 %v528
          %547 = vmatpush.msra.mxu0 %v527
          %548 = vmatpush.msra.mxu0 %v526
          %549 = vmatpush.msra.mxu0 %v525
          %550 = vmatpush.msra.mxu0 %v524
          %551 = vmatpush.msra.mxu0 %v523
          %552 = vmatmul.f32.gmra.mxu0 %v534
          %v553 = vpop.f32.mrf.mxu0
          %v554 = vadd.f32 %v531, %v553
          %555 = vdwg.mxu0
          %v556 = vmax.f32 %v554, 0.0
          %v557 = vld [vmem:[%s3] sm:$0xf]
          %v558 = vld [vmem:[%s4] sm:$0x1]
          %vm559 = vcmask 31744
          %v561 = vsel %vm559, %v556, 0
          %vm563 = vcmask 1043456
          %v565 = vsel %vm563, %v557, 0
          %567 = vmatpush.msra.mxu0 0.0
          %568 = vmatpush.msra.mxu0 0.0
          %569 = vmatpush.msra.mxu0 0.0
          %570 = vmatpush.msra.mxu0 0.0
          %571 = vmatpush.msra.mxu0 0.0
          %572 = vmatpush.msra.mxu0 0.0
          %573 = vmatpush.msra.mxu0 0.0
          %574 = vmatpush.msra.mxu0 0.0
          %575 = vmatpush.msra.mxu0 0.0
          %576 = vmatpush.msra.mxu0 0.0
          %577 = vmatpush.msra.mxu0 0.0
          %578 = vmatpush.msra.mxu0 0.0
          %579 = vmatpush.msra.mxu0 0.0
          %580 = vmatpush.msra.mxu0 0.0
          %581 = vmatpush.msra.mxu0 0.0
          %582 = vmatpush.msra.mxu0 %v565
          %583 = vmatmul.f32.gmra.mxu0 %v561
          %v584 = vpop.f32.mrf.mxu0
          %v585 = vadd.f32 %v558, %v584
          %586 = vdwg.mxu0
          %v587 = vxor.u32 %v585, 2147483648
          %v588 = vmul.f32 %v587, 1.442695
          %v589 = vpow.pop %v588
          %v590 = vadd.f32 %v589, 1.0
          %v591 = vrcp.pop %v590
          %v592 = vmul.f32 %v590, %v591
          %v593 = vsub.f32 1.0, %v592
          %v594 = vmul.f32 %v591, %v593
          %v595 = vadd.f32 %v591, %v594
          %vm596 = vweird.f32 %v590
          %vm597 = vweird.f32 %v591
          %vm598 = vmor %vm596, %vm597
          %v599 = vsel %vm598, %v591, %v595
          %v600 = vand.u32 2147483647, %v590
          %vm601 = vcmp.eq.f32.partialorder %v600, 8.507059e+37
          %v602 = vand.u32 %v590, 2147483648
          %v603 = vor.u32 1.1754944e-38, %v602
          %v604 = vsel %vm601, %v603, %v599
          %v605 = vmul.f32 1.0, %v604
          %606 = vst.msk [vmem:[%s259] sm:$0x1] %vm516, %v605
        $region52: #{tpu_custom_call.1} parent=39 // pred_fallthru
          _
        %s607 = sand.u32 %s154, 1
        %s608 = scalar_lea.sflag [#allocation5], %s607
        %s609 = sand.u32 %s154, 1
        %s610 = scalar_lea.vmem [#allocation6], %s609
        // Predicated region
        $region53: #{tpu_custom_call.1} parent=39 // pred_check
          %p611 = pneg %p164
        $region54: #{tpu_custom_call.1} parent=39 // pred_check_branch
          %613 = sbr.rel (%p611) target = $region56
        $region55: #{tpu_custom_call.1} parent=39 // pred_region
          %615 = vsyncadd %s608, 0
          %s616 = scalar_lea.hbm %s5, %s26
          %s618 = sshll.u32 %s610, 4
          %s619 = int_to_ptr.vmem [resolvable:$true] %s618
          %s620 = sshll.u32 %s616, 4
          %s621 = int_to_ptr.hbm [resolvable:$true] %s620
          %623 = dma.vmem_to_hbm [thread:$0]  %s619, 16, %s621, %s608
        $region56: #{tpu_custom_call.1} parent=39 // pred_fallthru
          _
      $region40: #{tpu_custom_call.1} parent=5 // pred_fallthru
        _
      %p624 = scmp.le.s32.totalorder 2, %s17
      // Predicated region
      $region57: #{tpu_custom_call.1} parent=5 // pred_check
        %p625 = pneg %p624
      $region58: #{tpu_custom_call.1} parent=5 // pred_check_branch
        %627 = sbr.rel (%p625) target = $region60
      $region59: #{tpu_custom_call.1} parent=5 // pred_region
        %s628 = ssub.s32 %s17, 2
        // Predicated region
        $region61: #{tpu_custom_call.1} parent=59 // pred_check
          %p629 = pneg %p170
        $region62: #{tpu_custom_call.1} parent=59 // pred_check_branch
          %631 = sbr.rel (%p629) target = $region64
        $region63: #{tpu_custom_call.1} parent=59 // pred_region
          %s632 = sand.u32 %s155, 1
          %s633 = scalar_lea.sflag [#allocation5], %s632
          %s634 = sand.u32 %s155, 1
          %s635 = scalar_lea.vmem [#allocation6], %s634
          %637 = dma.done %s633, 16
        $region64: #{tpu_custom_call.1} parent=59 // pred_fallthru
          _
      $region60: #{tpu_custom_call.1} parent=5 // pred_fallthru
        _
    $region6: #{tpu_custom_call.1} parent=1 // loop_footer
      %s21 = sadd.s32 1, %s17
    $region7: #{tpu_custom_call.1} parent=1 // loop_footer_branch
      %16 = sbr.rel target = $region3
    $region8: #{tpu_custom_call.1} parent=1 // loop_exit
      _
    %638 = vsyncpa [#allocation4], 1
    %s639 = scalar_lea.sflag [#allocation4], 1
    %640 = vsyncpa %s639, 1
    %641 = vsyncpa [#allocation5], 1
    %s642 = scalar_lea.sflag [#allocation5], 1
    %643 = vsyncpa %s642, 1

</llo_original>
